<compile_context>
chip_gen: v7x
topology: tpu7x:2x2x1
jax: 0.10.0
libtpu: 0.0.40
codegen_flags: <defaults>
</compile_context>

<pallas_src>
import functools

import jax
import jax.numpy as jnp
from jax.experimental import pallas as pl
from jax.experimental.pallas import tpu as pltpu


# ---------------------------------------------------------------------------
# Kernel 1: conv as lane-dense MXU matmul + fused BN partial statistics
#   w_ref     : (C_out, K)       bf16  (resident across the whole grid)
#   p_ref     : (1, K, TM)       bf16  (one M-tile of patches^T for one batch)
#   o_ref     : (1, C_out, TM)   bf16  conv output tile (lane dim = TM >= 128)
#   stats_ref : (1, 1, C_out, 2) f32   [:, 0] = sum over TM, [:, 1] = sum of squares
# Conv bias is intentionally absent: batch-stat BatchNorm cancels it exactly.
# ---------------------------------------------------------------------------
def _conv_stats_kernel(w_ref, p_ref, o_ref, stats_ref):
    y = jnp.dot(w_ref[...], p_ref[0], preferred_element_type=jnp.float32)
    o_ref[0] = y.astype(o_ref.dtype)                        # bf16 intermediate
    s1 = jnp.sum(y, axis=1, keepdims=True)                  # (C_out, 1) f32
    s2 = jnp.sum(y * y, axis=1, keepdims=True)              # (C_out, 1) f32
    stats_ref[0, 0] = jnp.concatenate([s1, s2], axis=1)     # one small store


# ---------------------------------------------------------------------------
# Kernel 2: fused BatchNorm affine + activation (all f32 VPU/EUP work)
#   x_ref  : (1, C_out, TM) bf16  conv intermediate
#   bn_ref : (C_out, 2)     f32   [:, 0] = gamma/sqrt(var+eps), [:, 1] = beta - mean*scale
#   o_ref  : (1, C_out, TM) f32   module output tile
# ---------------------------------------------------------------------------
def _bn_act_kernel(x_ref, bn_ref, o_ref, *, sigmoid):
    x = x_ref[0].astype(jnp.float32)
    scale = bn_ref[:, 0:1]
    shift = bn_ref[:, 1:2]
    y = x * scale + shift
    o_ref[0] = jax.nn.sigmoid(y) if sigmoid else jnp.maximum(y, 0.0)


# ---------------------------------------------------------------------------
# Wrapper
# ---------------------------------------------------------------------------
def patch_conv_forward(x, conv_w, conv_b, gamma, beta, *, strides=2,
                       last_layer=False, eps=1e-5, tm=8192):
    del conv_b  # cancelled by batch-statistics BatchNorm (training-mode BN)

    B, C_in, H, W = x.shape
    C_out = conv_w.shape[0]
    kh = kw = 4
    pad = 1
    Ho = (H + 2 * pad - kh) // strides + 1
    Wo = (W + 2 * pad - kw) // strides + 1
    K = C_in * kh * kw
    Mb = Ho * Wo                                  # output pixels per batch

    # ---- M tile selection ---------------------------------------------------
    # VMEM working-set budget (double-buffered tiles), v7x-safe (64 MiB / TC).
    vmem_tile_budget = 24 << 20
    cap_k1 = vmem_tile_budget // (4 * (K + C_out))   # 2 bufs * (K*tm*2 + C_out*tm*2)
    cap_k2 = vmem_tile_budget // (12 * C_out)        # 2 bufs * (C_out*tm*(2 + 4))
    tm_cap = max(128, (min(cap_k1, cap_k2) // 128) * 128)

    tm = max(128, (tm // 128) * 128)
    tm_target = min(tm, tm_cap)

    if Mb % 128 == 0:
        # Pick the largest multiple of 128 that divides Mb and fits the target
        # => Mp == Mb: no patches padding, no output slice copy.
        units = Mb // 128
        d = min(tm_target // 128, units)
        while units % d != 0:
            d -= 1
        tm_eff = d * 128
        Mp = Mb
    else:
        tm_eff = min(tm_target, pl.cdiv(Mb, 128) * 128)
        Mp = pl.cdiv(Mb, tm_eff) * tm_eff
    n_mt = Mp // tm_eff

    # ---- im2col glue (all in bf16): patches^T (B, K, Mb) --------------------
    xb = x.astype(jnp.bfloat16)                                   # cast FIRST
    xp = jnp.pad(xb, ((0, 0), (0, 0), (pad, pad), (pad, pad)))
    cols = [xp[:, :, i:i + strides * Ho:strides, j:j + strides * Wo:strides]
            for i in range(kh) for j in range(kw)]
    # (B, C_in, kh*kw, Ho, Wo) -> (B, K, Mb); K order = (C_in, kh, kw) matches
    # PyTorch's (C_out, C_in, kh, kw) weight flattening -> no weight permute.
    patches_t = jnp.stack(cols, axis=2).reshape(B, K, Mb)
    if Mp != Mb:
        patches_t = jnp.pad(patches_t, ((0, 0), (0, 0), (0, Mp - Mb)))

    w_flat = conv_w.reshape(C_out, K).astype(jnp.bfloat16)        # MXU operand

    # ---- scoped-VMEM limit: sized from the chosen tiles, v7x-safe cap -------
    k1_bytes = (2 * (K * tm_eff * 2 + C_out * tm_eff * 2 + C_out * 2 * 4)
                + 2 * C_out * K * 2)
    k2_bytes = 2 * (C_out * tm_eff * 2 + C_out * tm_eff * 4) + 2 * C_out * 2 * 4
    est = max(k1_bytes, k2_bytes) + (1 << 20)
    vmem_limit = int(min(max(32 << 20, 2 * est), 48 << 20))

    # ---- Pallas kernel 1: conv matmul + per-tile BN partial sums ------------
    conv_out, stats = pl.pallas_call(
        _conv_stats_kernel,
        out_shape=(
            jax.ShapeDtypeStruct((B, C_out, Mp), jnp.bfloat16),
            jax.ShapeDtypeStruct((B, n_mt, C_out, 2), jnp.float32),
        ),
        grid=(B, n_mt),
        in_specs=[
            pl.BlockSpec((C_out, K), lambda b, m: (0, 0)),
            pl.BlockSpec((1, K, tm_eff), lambda b, m: (b, 0, m)),
        ],
        out_specs=(
            pl.BlockSpec((1, C_out, tm_eff), lambda b, m: (b, 0, m)),
            pl.BlockSpec((1, 1, C_out, 2), lambda b, m: (b, m, 0, 0)),
        ),
        compiler_params=pltpu.CompilerParams(
            dimension_semantics=("parallel", "parallel"),
            vmem_limit_bytes=vmem_limit),
    )(w_flat, patches_t)

    # ---- tiny cross-tile reduction + BN scale/shift (f32 JAX glue) ----------
    # Zero-padded M positions contribute 0 to both sums; divide by true count.
    count = jnp.float32(B * Mb)
    sum_c = jnp.sum(stats[..., 0], axis=(0, 1))                   # (C_out,)
    sumsq_c = jnp.sum(stats[..., 1], axis=(0, 1))                 # (C_out,)
    mean = sum_c / count
    var = sumsq_c / count - mean * mean                           # biased (PyTorch BN)
    var = jnp.maximum(var, 0.0)                                   # guard cancellation
    inv_std = jax.lax.rsqrt(var + eps)
    scale = gamma.astype(jnp.float32) * inv_std
    shift = beta.astype(jnp.float32) - mean * scale
    bn_params = jnp.stack([scale, shift], axis=1)                 # (C_out, 2)

    # ---- Pallas kernel 2: fused BN affine + activation -----------------------
    out = pl.pallas_call(
        functools.partial(_bn_act_kernel, sigmoid=last_layer),
        out_shape=jax.ShapeDtypeStruct((B, C_out, Mp), jnp.float32),
        grid=(B, n_mt),
        in_specs=[
            pl.BlockSpec((1, C_out, tm_eff), lambda b, m: (b, 0, m)),
            pl.BlockSpec((C_out, 2), lambda b, m: (0, 0)),
        ],
        out_specs=pl.BlockSpec((1, C_out, tm_eff), lambda b, m: (b, 0, m)),
        compiler_params=pltpu.CompilerParams(
            dimension_semantics=("parallel", "parallel"),
            vmem_limit_bytes=vmem_limit),
    )(conv_out, bn_params)

    # Already NCHW-ordered: drop M padding only if it exists, restore spatial.
    if Mp != Mb:
        out = out[:, :, :Mb]
    return out.reshape(B, C_out, Ho, Wo)


# ---------------------------------------------------------------------------
# Reference (plain JAX) for verification — includes the conv bias to prove the
# bias-cancellation is exact under batch-statistics BN.
# ---------------------------------------------------------------------------
def _reference(x, conv_w, conv_b, gamma, beta, *, last_layer=False, eps=1e-5):
    y = jax.lax.conv_general_dilated(
        x, conv_w, window_strides=(2, 2), padding=((1, 1), (1, 1)),
        dimension_numbers=("NCHW", "OIHW", "NCHW"))
    y = y + conv_b.reshape(1, -1, 1, 1)
    m = jnp.mean(y, axis=(0, 2, 3), keepdims=True)
    v = jnp.mean((y - m) ** 2, axis=(0, 2, 3), keepdims=True)
    y = gamma.reshape(1, -1, 1, 1) * (y - m) / jnp.sqrt(v + eps) \
        + beta.reshape(1, -1, 1, 1)
    return jax.nn.sigmoid(y) if last_layer else jnp.maximum(y, 0.0)


if __name__ == "__main__":
    key = jax.random.PRNGKey(0)
    kx, kw_, kb = jax.random.split(key, 3)

    B, C_in, H, W = 2, 4, 16, 16
    C_out = 8

    x = jax.random.normal(kx, (B, C_in, H, W), jnp.float32)
    conv_w = 0.1 * jax.random.normal(kw_, (C_out, C_in, 4, 4), jnp.float32)
    conv_b = 0.1 * jax.random.normal(kb, (C_out,), jnp.float32)
    gamma = jnp.ones((C_out,), jnp.float32)   # PyTorch BN default affine
    beta = jnp.zeros((C_out,), jnp.float32)

    fwd = jax.jit(patch_conv_forward,
                  static_argnames=("strides", "last_layer", "eps", "tm"))

    # ReLU branch (last_layer=False)
    out = jax.block_until_ready(fwd(x, conv_w, conv_b, gamma, beta,
                                    strides=2, last_layer=False))
    ref = _reference(x, conv_w, conv_b, gamma, beta, last_layer=False)
    assert out.shape == (B, C_out, H // 2, W // 2)
    assert jnp.allclose(out, ref, atol=2e-2, rtol=2e-2), \
        float(jnp.max(jnp.abs(out - ref)))

    # Sigmoid branch (last_layer=True)
    out_s = jax.block_until_ready(fwd(x, conv_w, conv_b, gamma, beta,
                                      strides=2, last_layer=True))
    ref_s = _reference(x, conv_w, conv_b, gamma, beta, last_layer=True)
    assert jnp.allclose(out_s, ref_s, atol=2e-2, rtol=2e-2), \
        float(jnp.max(jnp.abs(out_s - ref_s)))

    print("KERNEL_OK")
</pallas_src>

<mosaic_0001>
module attributes {stable_mosaic.version = 11 : i64} {
  func.func @_conv_stats_kernel(%arg0: i32, %arg1: i32, %arg2: memref<8x64xbf16, #tpu.memory_space<vmem>>, %arg3: memref<1x64x128xbf16, #tpu.memory_space<vmem>>, %arg4: memref<1x8x128xbf16, #tpu.memory_space<vmem>>, %arg5: memref<1x1x8x2xf32, #tpu.memory_space<vmem>>) attributes {dimension_semantics = [#tpu.dimension_semantics<parallel>, #tpu.dimension_semantics<parallel>], iteration_bounds = array<i64: 2, 1>, scalar_prefetch = 0 : i64, scratch_operands = 0 : i64, tpu.core_type = #tpu.core_type<tc>, window_params = [{pipeline_mode = #tpu.pipeline_mode<synchronous>, transform_indices = @transform_0, window_bounds = array<i64: 8, 64>}, {transform_indices = @transform_1, window_bounds = array<i64: 1, 64, 128>}, {transform_indices = @transform_2, window_bounds = array<i64: 1, 8, 128>}, {transform_indices = @transform_3, window_bounds = array<i64: 1, 1, 8, 2>}]} {
    %c0 = arith.constant 0 : index
    %c0_0 = arith.constant 0 : index
    %0 = vector.load %arg2[%c0, %c0_0] : memref<8x64xbf16, #tpu.memory_space<vmem>>, vector<8x64xbf16>
    %c0_1 = arith.constant 0 : index
    %c0_2 = arith.constant 0 : index
    %c0_3 = arith.constant 0 : index
    %1 = vector.load %arg3[%c0_1, %c0_2, %c0_3] : memref<1x64x128xbf16, #tpu.memory_space<vmem>>, vector<1x64x128xbf16>
    %2 = vector.shape_cast %1 : vector<1x64x128xbf16> to vector<64x128xbf16>
    %cst = arith.constant dense<0.000000e+00> : vector<8x128xf32>
    %3 = tpu.matmul %0, %2, %cst {dimension_numbers = #tpu.dot_dimension_numbers<[1], [0], [0], [1], [0, 0, 1, 1], [], []>} : vector<8x64xbf16>, vector<64x128xbf16>, vector<8x128xf32> -> vector<8x128xf32>
    %4 = arith.truncf %3 : vector<8x128xf32> to vector<8x128xbf16>
    %c0_4 = arith.constant 0 : index
    %c0_5 = arith.constant 0 : index
    %c0_6 = arith.constant 0 : index
    %5 = vector.load %arg4[%c0_4, %c0_5, %c0_6] : memref<1x8x128xbf16, #tpu.memory_space<vmem>>, vector<1x8x128xbf16>
    %6 = vector.shape_cast %5 : vector<1x8x128xbf16> to vector<8x128xbf16>
    %7 = vector.shape_cast %4 : vector<8x128xbf16> to vector<1x8x128xbf16>
    tpu.vector_store %arg4[%c0_4, %c0_5, %c0_6], %7 {strides = array<i32>} : memref<1x8x128xbf16, #tpu.memory_space<vmem>>, vector<1x8x128xbf16>,
    %cst_7 = arith.constant dense<0.000000e+00> : vector<8xf32>
    %8 = vector.multi_reduction <add>, %3, %cst_7 [1] : vector<8x128xf32> to vector<8xf32>
    %9 = vector.shape_cast %8 : vector<8xf32> to vector<8x1xf32>
    %10 = arith.mulf %3, %3 : vector<8x128xf32>
    %cst_8 = arith.constant dense<0.000000e+00> : vector<8xf32>
    %11 = vector.multi_reduction <add>, %10, %cst_8 [1] : vector<8x128xf32> to vector<8xf32>
    %12 = vector.shape_cast %11 : vector<8xf32> to vector<8x1xf32>
    %13 = tpu.concatenate %9, %12 in 1 : vector<8x1xf32>, vector<8x1xf32> -> vector<8x2xf32>
    %c0_9 = arith.constant 0 : index
    %c0_10 = arith.constant 0 : index
    %c0_11 = arith.constant 0 : index
    %c0_12 = arith.constant 0 : index
    %14 = vector.load %arg5[%c0_9, %c0_10, %c0_11, %c0_12] : memref<1x1x8x2xf32, #tpu.memory_space<vmem>>, vector<1x1x8x2xf32>
    %15 = vector.shape_cast %14 : vector<1x1x8x2xf32> to vector<8x2xf32>
    %16 = vector.shape_cast %13 : vector<8x2xf32> to vector<1x1x8x2xf32>
    tpu.vector_store %arg5[%c0_9, %c0_10, %c0_11, %c0_12], %16 {strides = array<i32>} : memref<1x1x8x2xf32, #tpu.memory_space<vmem>>, vector<1x1x8x2xf32>,
    return
  }
  func.func @transform_0(%arg0: i32, %arg1: i32) -> (i32, i32) {
    %c0_i32 = arith.constant 0 : i32
    %c0_i32_0 = arith.constant 0 : i32
    %c0_i32_1 = arith.constant 0 : i32
    return %c0_i32, %c0_i32_0 : i32, i32
  }
  func.func @transform_1(%arg0: i32, %arg1: i32) -> (i32, i32, i32) {
    %c0_i32 = arith.constant 0 : i32
    %c0_i32_0 = arith.constant 0 : i32
    return %arg0, %c0_i32, %arg1 : i32, i32, i32
  }
  func.func @transform_2(%arg0: i32, %arg1: i32) -> (i32, i32, i32) {
    %c0_i32 = arith.constant 0 : i32
    %c0_i32_0 = arith.constant 0 : i32
    return %arg0, %c0_i32, %arg1 : i32, i32, i32
  }
  func.func @transform_3(%arg0: i32, %arg1: i32) -> (i32, i32, i32, i32) {
    %c0_i32 = arith.constant 0 : i32
    %c0_i32_0 = arith.constant 0 : i32
    %c0_i32_1 = arith.constant 0 : i32
    return %arg0, %arg1, %c0_i32, %c0_i32_0 : i32, i32, i32, i32
  }
}

module attributes {stable_mosaic.version = 11 : i64} {
  func.func @_bn_act_kernel(%arg0: i32, %arg1: i32, %arg2: memref<1x8x128xbf16, #tpu.memory_space<vmem>>, %arg3: memref<8x2xf32, #tpu.memory_space<vmem>>, %arg4: memref<1x8x128xf32, #tpu.memory_space<vmem>>) attributes {dimension_semantics = [#tpu.dimension_semantics<parallel>, #tpu.dimension_semantics<parallel>], iteration_bounds = array<i64: 2, 1>, scalar_prefetch = 0 : i64, scratch_operands = 0 : i64, tpu.core_type = #tpu.core_type<tc>, window_params = [{transform_indices = @transform_0, window_bounds = array<i64: 1, 8, 128>}, {pipeline_mode = #tpu.pipeline_mode<synchronous>, transform_indices = @transform_1, window_bounds = array<i64: 8, 2>}, {transform_indices = @transform_2, window_bounds = array<i64: 1, 8, 128>}]} {
    %c0 = arith.constant 0 : index
    %c0_0 = arith.constant 0 : index
    %c0_1 = arith.constant 0 : index
    %0 = vector.load %arg2[%c0, %c0_0, %c0_1] : memref<1x8x128xbf16, #tpu.memory_space<vmem>>, vector<1x8x128xbf16>
    %1 = vector.shape_cast %0 : vector<1x8x128xbf16> to vector<8x128xbf16>
    %2 = arith.extf %1 : vector<8x128xbf16> to vector<8x128xf32>
    %c0_2 = arith.constant 0 : index
    %c0_3 = arith.constant 0 : index
    %3 = vector.load %arg3[%c0_2, %c0_3] : memref<8x2xf32, #tpu.memory_space<vmem>>, vector<8x1xf32>
    %c0_4 = arith.constant 0 : index
    %c1 = arith.constant 1 : index
    %4 = vector.load %arg3[%c0_4, %c1] : memref<8x2xf32, #tpu.memory_space<vmem>>, vector<8x1xf32>
    %5 = vector.broadcast %3 : vector<8x1xf32> to vector<8x128xf32>
    %6 = arith.mulf %2, %5 : vector<8x128xf32>
    %7 = vector.broadcast %4 : vector<8x1xf32> to vector<8x128xf32>
    %8 = arith.addf %6, %7 : vector<8x128xf32>
    %cst = arith.constant 0.000000e+00 : f32
    %9 = vector.broadcast %cst : f32 to vector<8x128xf32>
    %10 = arith.maximumf %8, %9 : vector<8x128xf32>
    %c0_5 = arith.constant 0 : index
    %c0_6 = arith.constant 0 : index
    %c0_7 = arith.constant 0 : index
    %11 = vector.load %arg4[%c0_5, %c0_6, %c0_7] : memref<1x8x128xf32, #tpu.memory_space<vmem>>, vector<1x8x128xf32>
    %12 = vector.shape_cast %11 : vector<1x8x128xf32> to vector<8x128xf32>
    %13 = vector.shape_cast %10 : vector<8x128xf32> to vector<1x8x128xf32>
    tpu.vector_store %arg4[%c0_5, %c0_6, %c0_7], %13 {strides = array<i32>} : memref<1x8x128xf32, #tpu.memory_space<vmem>>, vector<1x8x128xf32>,
    return
  }
  func.func @transform_0(%arg0: i32, %arg1: i32) -> (i32, i32, i32) {
    %c0_i32 = arith.constant 0 : i32
    %c0_i32_0 = arith.constant 0 : i32
    return %arg0, %c0_i32, %arg1 : i32, i32, i32
  }
  func.func @transform_1(%arg0: i32, %arg1: i32) -> (i32, i32) {
    %c0_i32 = arith.constant 0 : i32
    %c0_i32_0 = arith.constant 0 : i32
    %c0_i32_1 = arith.constant 0 : i32
    return %c0_i32, %c0_i32_0 : i32, i32
  }
  func.func @transform_2(%arg0: i32, %arg1: i32) -> (i32, i32, i32) {
    %c0_i32 = arith.constant 0 : i32
    %c0_i32_0 = arith.constant 0 : i32
    return %arg0, %c0_i32, %arg1 : i32, i32, i32
  }
}

</mosaic_0001>

<llo_original>
// kernel: patch_conv_forward.2
$region0: #{patch_conv_forward.2}
  #allocation0 [shape = 'u32[]', space=smem, size = 0x4, offset = 0x4, fixed_abs, tag = 'smem constant byte address 0x4 - core index']
  #allocation1 [shape = 'u32[144,128]{1,0:T(1,128)}', space=vmem, size = 0x12000, scoped, tag = 'internal scratch']
  %s0 = inlined_call_operand.vmem [shape: bf16[8,64], index: 0, kind: input, shape index: {}]
  %s1 = inlined_call_operand.vmem [shape: bf16[2,64,128], index: 1, kind: input, shape index: {}]
  %s2 = inlined_call_operand.vmem [shape: bf16[2,8,128], index: 2, kind: output, shape index: {0}]
  %s3 = inlined_call_operand.vmem [shape: f32[2,1,8,2], index: 3, kind: output, shape index: {1}]
  %4 = xla_tuple %s2, %s3
  %s5 = sld [smem:[#allocation0]]
  $region49: #{patch_conv_forward.2} parent=0
    _
  %s7 = ssub.s32 1, %s5
  %s8 = scalar_select 0, %s7, %s5
  loop: start=0, step=1, limit=4
  $region2: #{patch_conv_forward.2} parent=0 // loop_pre_header
    _
  $region3: #{patch_conv_forward.2} parent=0 // loop_header
    %s10 = sphi 0, %s14
    %p11 = scmp.ge.s32.totalorder %s10, 4
    %s17 = sphi 0, %s29
    %s18 = sphi 0, %s25
    %s19 = sphi 0, %s17
    %s20 = sphi 0, %s18
    %s21 = sphi 0, %s19
    %s22 = sphi 0, %s20
    %s30 = sphi 0, %s30
    %s32 = sphi 0, %s30
    %s33 = sphi 0, %s32
    %s47 = sphi 0, %s33
    %s55 = sphi 0, %s57
    %s58 = sphi 0, %s55
    %s59 = sphi 0, %s58
    %s75 = sphi 0, %s59
    %s83 = sphi 0, %s85
    %s86 = sphi 0, %s83
    %s87 = sphi 0, %s86
    %s103 = sphi 0, %s87
    %s111 = sphi 0, %s113
    %s114 = sphi 0, %s111
    %s115 = sphi 0, %s114
    %s131 = sphi 0, %s115
  $region4: #{patch_conv_forward.2} parent=0 // loop_header_branch
    %13 = sbr.rel (%p11) target = $region8
  $region5: #{patch_conv_forward.2} parent=0 // loop_body
    %s15 = ssub.s32 %s10, 1
    %s16 = ssub.s32 %s10, 2
    %s23 = sadd.s32 1, %s18
    %p24 = scmp.ge.s32.totalorder %s23, 1
    %s25 = scalar_select %p24, 0, %s23
    %s26 = sadd.s32 1, %s17
    %s27 = scalar_select %p24, %s26, %s17
    %p28 = scmp.ge.s32.totalorder %s27, 2
    %s29 = scalar_select %p28, 0, %s27
    %s31 = sadd.s32 %s30, 1
    %p34 = scmp.eq.s32.totalorder %s10, 1
    %p35 = scmp.ne.s32.totalorder %s30, %s32
    %p36 = scmp.eq.s32.totalorder %s10, 0
    %p37 = por %p35, %p36
    %p38 = scmp.ne.s32.totalorder %s30, %s32
    %p39 = scmp.eq.s32.totalorder %s15, 1
    %p40 = por %p38, %p39
    %p41 = scmp.ne.s32.totalorder %s32, %s33
    %p42 = scmp.eq.s32.totalorder %s15, 0
    %p43 = por %p41, %p42
    %p44 = scmp.ne.s32.totalorder %s32, %s33
    %p45 = scmp.eq.s32.totalorder %s16, 1
    %p46 = por %p44, %p45
    %p48 = scmp.ne.s32.totalorder %s33, %s47
    %p49 = scmp.eq.s32.totalorder %s16, 0
    %p50 = por %p48, %p49
    %s51 = ssub.s32 %s17, %s29
    %s52 = ssub.s32 %s18, %s25
    %s53 = sor.u32 %s51, %s52
    %p54 = scmp.eq.s32.totalorder %s53, 0
    %s56 = sadd.s32 %s55, 1
    %s57 = scalar_select %p54, %s55, %s56
    %p60 = pneg %p54
    %p61 = scmp.eq.s32.totalorder %s10, 1
    %p62 = por %p60, %p61
    %p63 = scmp.ne.s32.totalorder %s55, %s58
    %p64 = scmp.eq.s32.totalorder %s10, 0
    %p65 = por %p63, %p64
    %p66 = scmp.ne.s32.totalorder %s55, %s58
    %p67 = scmp.eq.s32.totalorder %s15, 1
    %p68 = por %p66, %p67
    %p69 = scmp.ne.s32.totalorder %s58, %s59
    %p70 = scmp.eq.s32.totalorder %s15, 0
    %p71 = por %p69, %p70
    %p72 = scmp.ne.s32.totalorder %s58, %s59
    %p73 = scmp.eq.s32.totalorder %s16, 1
    %p74 = por %p72, %p73
    %p76 = scmp.ne.s32.totalorder %s59, %s75
    %p77 = scmp.eq.s32.totalorder %s16, 0
    %p78 = por %p76, %p77
    %s79 = ssub.s32 %s17, %s29
    %s80 = ssub.s32 %s18, %s25
    %s81 = sor.u32 %s79, %s80
    %p82 = scmp.eq.s32.totalorder %s81, 0
    %s84 = sadd.s32 %s83, 1
    %s85 = scalar_select %p82, %s83, %s84
    %p88 = pneg %p82
    %p89 = scmp.eq.s32.totalorder %s10, 1
    %p90 = por %p88, %p89
    %p91 = scmp.ne.s32.totalorder %s83, %s86
    %p92 = scmp.eq.s32.totalorder %s10, 0
    %p93 = por %p91, %p92
    %p94 = scmp.ne.s32.totalorder %s83, %s86
    %p95 = scmp.eq.s32.totalorder %s15, 1
    %p96 = por %p94, %p95
    %p97 = scmp.ne.s32.totalorder %s86, %s87
    %p98 = scmp.eq.s32.totalorder %s15, 0
    %p99 = por %p97, %p98
    %p100 = scmp.ne.s32.totalorder %s86, %s87
    %p101 = scmp.eq.s32.totalorder %s16, 1
    %p102 = por %p100, %p101
    %p104 = scmp.ne.s32.totalorder %s87, %s103
    %p105 = scmp.eq.s32.totalorder %s16, 0
    %p106 = por %p104, %p105
    %s107 = ssub.s32 %s17, %s29
    %s108 = ssub.s32 %s18, %s25
    %s109 = sor.u32 %s107, %s108
    %p110 = scmp.eq.s32.totalorder %s109, 0
    %s112 = sadd.s32 %s111, 1
    %s113 = scalar_select %p110, %s111, %s112
    %p116 = pneg %p110
    %p117 = scmp.eq.s32.totalorder %s10, 1
    %p118 = por %p116, %p117
    %p119 = scmp.ne.s32.totalorder %s111, %s114
    %p120 = scmp.eq.s32.totalorder %s10, 0
    %p121 = por %p119, %p120
    %p122 = scmp.ne.s32.totalorder %s111, %s114
    %p123 = scmp.eq.s32.totalorder %s15, 1
    %p124 = por %p122, %p123
    %p125 = scmp.ne.s32.totalorder %s114, %s115
    %p126 = scmp.eq.s32.totalorder %s15, 0
    %p127 = por %p125, %p126
    %p128 = scmp.ne.s32.totalorder %s114, %s115
    %p129 = scmp.eq.s32.totalorder %s16, 1
    %p130 = por %p128, %p129
    %p132 = scmp.ne.s32.totalorder %s115, %s131
    %p133 = scmp.eq.s32.totalorder %s16, 0
    %p134 = por %p132, %p133
    %p135 = scmp.le.s32.totalorder 1, %s10
    %p136 = scmp.lt.s32.totalorder %s10, 3
    %p137 = pnand %p135, %p136
    %p138 = pneg %p137
    // Predicated region
    $region9: #{patch_conv_forward.2} parent=5 // pred_check
      _
    $region10: #{patch_conv_forward.2} parent=5 // pred_check_branch
      %140 = sbr.rel (%p137) target = $region12
    $region11: #{patch_conv_forward.2} parent=5 // pred_region
      %s141 = ssub.s32 %s10, 1
      // Predicated region
      $region13: #{patch_conv_forward.2} parent=11 // pred_check
        %p142 = pneg %p43
      $region14: #{patch_conv_forward.2} parent=11 // pred_check_branch
        %144 = sbr.rel (%p142) target = $region16
      $region15: #{patch_conv_forward.2} parent=11 // pred_region
        _
      $region16: #{patch_conv_forward.2} parent=11 // pred_fallthru
        _
    $region12: #{patch_conv_forward.2} parent=5 // pred_fallthru
      _
    %p145 = scmp.lt.s32.totalorder %s10, 2
    // Predicated region
    $region17: #{patch_conv_forward.2} parent=5 // pred_check
      %p146 = pneg %p145
    $region18: #{patch_conv_forward.2} parent=5 // pred_check_branch
      %148 = sbr.rel (%p146) target = $region20
    $region19: #{patch_conv_forward.2} parent=5 // pred_region
      // Predicated region
      $region21: #{patch_conv_forward.2} parent=19 // pred_check
        %p149 = pneg %p65
      $region22: #{patch_conv_forward.2} parent=19 // pred_check_branch
        %151 = sbr.rel (%p149) target = $region24
      $region23: #{patch_conv_forward.2} parent=19 // pred_region
        %p152 = scmp.lt.s32.totalorder %s17, 1
        %s153 = scalar_select %p152, %s17, 1
        %p154 = scmp.lt.s32.totalorder %s18, 0
        %s155 = scalar_select %p154, %s18, 0
        %s156 = smul.addr %s153, 8
        %s157 = sadd.s32 %s155, %s156
        %s158 = smul.addr %s157, 4
        %s159 = scalar_lea.vmem %s1, %s158
      $region24: #{patch_conv_forward.2} parent=19 // pred_fallthru
        _
    $region20: #{patch_conv_forward.2} parent=5 // pred_fallthru
      _
    %p160 = scmp.le.s32.totalorder 1, %s10
    %p161 = scmp.lt.s32.totalorder %s10, 3
    %p162 = pnand %p160, %p161
    %p163 = pneg %p162
    // Predicated region
    $region25: #{patch_conv_forward.2} parent=5 // pred_check
      _
    $region26: #{patch_conv_forward.2} parent=5 // pred_check_branch
      %165 = sbr.rel (%p162) target = $region28
    $region27: #{patch_conv_forward.2} parent=5 // pred_region
      %s166 = ssub.s32 %s10, 1
      %p167 = pneg %p43
      %p168 = pneg %p40
      %p169 = scmp.lt.s32.totalorder %s19, 1
      %s170 = scalar_select %p169, %s19, 1
      %p171 = scmp.lt.s32.totalorder %s20, 0
      %s172 = scalar_select %p171, %s20, 0
      %s173 = smul.addr %s170, 8
      %s174 = sadd.s32 %s172, %s173
      %s175 = smul.addr %s174, 4
      %s176 = scalar_lea.vmem %s1, %s175
      %p177 = pneg %p71
      %p178 = pneg %p68
      %p179 = pneg %p99
      %p180 = pneg %p96
      %p181 = scmp.lt.s32.totalorder %s19, 1
      %s182 = scalar_select %p181, %s19, 1
      %p183 = scmp.lt.s32.totalorder %s20, 0
      %s184 = scalar_select %p183, %s20, 0
      %s185 = sadd.s32 %s184, %s182
      %s186 = smul.addr %s185, 4
      %s187 = scalar_lea.vmem %s2, %s186
      %p188 = pneg %p127
      %p189 = pneg %p124
      %p190 = scmp.lt.s32.totalorder %s19, 1
      %s191 = scalar_select %p190, %s19, 1
      %p192 = scmp.lt.s32.totalorder %s20, 0
      %s193 = scalar_select %p192, %s20, 0
      %s194 = sadd.s32 %s193, %s191
      %s195 = smul.addr %s194, 8
      %s196 = scalar_lea.vmem %s3, %s195
      %p197 = scmp.lt.s32.totalorder %s19, 1
      %s198 = scalar_select %p197, %s19, 1
      %p199 = scmp.lt.s32.totalorder %s20, 0
      %s200 = scalar_select %p199, %s20, 0
      %s201 = smul.addr %s198, 8
      %s202 = sadd.s32 %s200, %s201
      %s203 = smul.addr %s202, 4
      %s204 = scalar_lea.vmem %s1, %s203
      %p205 = scmp.lt.s32.totalorder %s19, 1
      %s206 = scalar_select %p205, %s19, 1
      %p207 = scmp.lt.s32.totalorder %s20, 0
      %s208 = scalar_select %p207, %s20, 0
      %s209 = sadd.s32 %s208, %s206
      %s210 = smul.addr %s209, 4
      %s211 = scalar_lea.vmem %s2, %s210
      %p212 = scmp.lt.s32.totalorder %s19, 1
      %s213 = scalar_select %p212, %s19, 1
      %p214 = scmp.lt.s32.totalorder %s20, 0
      %s215 = scalar_select %p214, %s20, 0
      %s216 = sadd.s32 %s215, %s213
      %s217 = smul.addr %s216, 8
      %s218 = scalar_lea.vmem %s3, %s217
      %v220 = vld [vmem:[%s0] sm:$0xf]
      %v221 = vld [vmem:[%s204] sm:$0xf]
      %v222 = vld [vmem:[%s204 + $0x4] sm:$0xf]
      %v223 = vld [vmem:[%s204 + $0x8] sm:$0xf]
      %v224 = vld [vmem:[%s204 + $0xc] sm:$0xf]
      %v225 = vld [vmem:[%s204 + $0x10] sm:$0xf]
      %v226 = vld [vmem:[%s204 + $0x14] sm:$0xf]
      %v227 = vld [vmem:[%s204 + $0x18] sm:$0xf]
      %v228 = vld [vmem:[%s204 + $0x1c] sm:$0xf]
      %v237 = vunpack.c.l.b16 %v221
      %v238 = vunpack.c.l.b16 %v222
      %v239 = vunpack.c.l.b16 %v223
      %v240 = vunpack.c.l.b16 %v224
      %v241 = vunpack.c.l.b16 %v225
      %v242 = vunpack.c.l.b16 %v226
      %v243 = vunpack.c.l.b16 %v227
      %v244 = vunpack.c.l.b16 %v228
      %v245 = vpack.c.b16 %v238, %v237
      %v246 = vpack.c.b16 %v240, %v239
      %v247 = vpack.c.b16 %v242, %v241
      %v248 = vpack.c.b16 %v244, %v243
      %vm253 = vcmask 523264
      %v255 = vsel %vm253, %v220, 0
      %257 = vmatprep.subr.bf16.mxu0 0
      %258 = vmatpush1.bf16.msra.mxu0 %v245
      %259 = vmatprep.subr.bf16.mxu0 0
      %260 = vmatpush1.bf16.msra.mxu0 %v246
      %261 = vmatprep.subr.bf16.mxu0 0
      %262 = vmatpush1.bf16.msra.mxu0 %v247
      %263 = vmatprep.subr.bf16.mxu0 0
      %264 = vmatpush1.bf16.msra.mxu0 %v248
      %265 = vmatprep.subr.bf16.mxu0 0
      %266 = vmatpush1.bf16.msra.mxu0 0
      %267 = vmatprep.subr.bf16.mxu0 0
      %268 = vmatpush1.bf16.msra.mxu0 0
      %269 = vmatprep.subr.bf16.mxu0 0
      %270 = vmatpush1.bf16.msra.mxu0 0
      %271 = vmatprep.subr.bf16.mxu0 0
      %272 = vmatpush1.bf16.msra.mxu0 0
      %273 = vmatprep.subr.bf16.mxu0 0
      %274 = vmatpush1.bf16.msra.mxu0 0
      %275 = vmatprep.subr.bf16.mxu0 0
      %276 = vmatpush1.bf16.msra.mxu0 0
      %277 = vmatprep.subr.bf16.mxu0 0
      %278 = vmatpush1.bf16.msra.mxu0 0
      %279 = vmatprep.subr.bf16.mxu0 0
      %280 = vmatpush1.bf16.msra.mxu0 0
      %281 = vmatprep.subr.bf16.mxu0 0
      %282 = vmatpush1.bf16.msra.mxu0 0
      %283 = vmatprep.subr.bf16.mxu0 0
      %284 = vmatpush1.bf16.msra.mxu0 0
      %285 = vmatprep.subr.bf16.mxu0 0
      %286 = vmatpush1.bf16.msra.mxu0 0
      %287 = vmatprep.subr.bf16.mxu0 0
      %288 = vmatpush1.bf16.msra.mxu0 0
      %289 = vmatprep.mubr.bf16.mxu0 0
      %290 = vmatmul.mubr.bf16.gmra.mrb[0].mxu0 %v255
      %v291 = vpop.f32.mrb[0].mxu0
      %v292 = vadd.f32 0.0, %v291
      %v293 = vpop.f32.mrb[0].mxu0
      %v294 = vpop.f32.mrb[0].mxu0
      %v295 = vpop.f32.mrb[0].mxu0
      %296 = vdwg.mxu0
      %v297 = vpack.c.bf16 %v292, %v292
      %298 = vst [vmem:[%s211] sm:$0xf] %v297
      %299 = vadd.xlane.f32.xlu0 %v292
      %v300 = vpop.xlane.xlu0 %299
      %v301 = vmul.f32 %v292, %v292
      %302 = vadd.xlane.f32.xlu0 %v301
      %v303 = vpop.xlane.xlu0 %302
      %vm304 = vcmask 7168
      %v305 = vsel %vm304, %v300, %v303
      %vm306 = vcmask 15360
      %307 = vst.msk [vmem:[%s218] sm:$0xff] %vm306, %v305
      %p308 = scmp.lt.s32.totalorder %s19, 1
      %s309 = scalar_select %p308, %s19, 1
      %p310 = scmp.lt.s32.totalorder %s20, 0
      %s311 = scalar_select %p310, %s20, 0
      %s312 = sadd.s32 %s311, %s309
      %s313 = smul.addr %s312, 4
      %s314 = scalar_lea.vmem %s2, %s313
      %p315 = scmp.lt.s32.totalorder %s19, 1
      %s316 = scalar_select %p315, %s19, 1
      %p317 = scmp.lt.s32.totalorder %s20, 0
      %s318 = scalar_select %p317, %s20, 0
      %s319 = sadd.s32 %s318, %s316
      %s320 = smul.addr %s319, 8
      %s321 = scalar_lea.vmem %s3, %s320
      // Predicated region
      $region29: #{patch_conv_forward.2} parent=27 // pred_check
        %p322 = pneg %p96
      $region30: #{patch_conv_forward.2} parent=27 // pred_check_branch
        %324 = sbr.rel (%p322) target = $region32
      $region31: #{patch_conv_forward.2} parent=27 // pred_region
        _
      $region32: #{patch_conv_forward.2} parent=27 // pred_fallthru
        _
      // Predicated region
      $region33: #{patch_conv_forward.2} parent=27 // pred_check
        %p325 = pneg %p124
      $region34: #{patch_conv_forward.2} parent=27 // pred_check_branch
        %327 = sbr.rel (%p325) target = $region36
      $region35: #{patch_conv_forward.2} parent=27 // pred_region
        _
      $region36: #{patch_conv_forward.2} parent=27 // pred_fallthru
        _
    $region28: #{patch_conv_forward.2} parent=5 // pred_fallthru
      _
    %p328 = scmp.le.s32.totalorder 2, %s10
    // Predicated region
    $region37: #{patch_conv_forward.2} parent=5 // pred_check
      %p329 = pneg %p328
    $region38: #{patch_conv_forward.2} parent=5 // pred_check_branch
      %331 = sbr.rel (%p329) target = $region40
    $region39: #{patch_conv_forward.2} parent=5 // pred_region
      %s332 = ssub.s32 %s10, 2
      // Predicated region
      $region41: #{patch_conv_forward.2} parent=39 // pred_check
        %p333 = pneg %p102
      $region42: #{patch_conv_forward.2} parent=39 // pred_check_branch
        %335 = sbr.rel (%p333) target = $region44
      $region43: #{patch_conv_forward.2} parent=39 // pred_region
        %p336 = scmp.lt.s32.totalorder %s21, 1
        %s337 = scalar_select %p336, %s21, 1
        %p338 = scmp.lt.s32.totalorder %s22, 0
        %s339 = scalar_select %p338, %s22, 0
        %s340 = sadd.s32 %s339, %s337
        %s341 = smul.addr %s340, 4
        %s342 = scalar_lea.vmem %s2, %s341
      $region44: #{patch_conv_forward.2} parent=39 // pred_fallthru
        _
      // Predicated region
      $region45: #{patch_conv_forward.2} parent=39 // pred_check
        %p343 = pneg %p130
      $region46: #{patch_conv_forward.2} parent=39 // pred_check_branch
        %345 = sbr.rel (%p343) target = $region48
      $region47: #{patch_conv_forward.2} parent=39 // pred_region
        %p346 = scmp.lt.s32.totalorder %s21, 1
        %s347 = scalar_select %p346, %s21, 1
        %p348 = scmp.lt.s32.totalorder %s22, 0
        %s349 = scalar_select %p348, %s22, 0
        %s350 = sadd.s32 %s349, %s347
        %s351 = smul.addr %s350, 8
        %s352 = scalar_lea.vmem %s3, %s351
      $region48: #{patch_conv_forward.2} parent=39 // pred_fallthru
        _
    $region40: #{patch_conv_forward.2} parent=5 // pred_fallthru
      _
  $region6: #{patch_conv_forward.2} parent=0 // loop_footer
    %s14 = sadd.s32 1, %s10
  $region7: #{patch_conv_forward.2} parent=0 // loop_footer_branch
    %9 = sbr.rel target = $region3
  $region8: #{patch_conv_forward.2} parent=0 // loop_exit
    _

// kernel: patch_conv_forward.3
$region0: #{patch_conv_forward.3}
  #allocation0 [shape = 'u32[]', space=smem, size = 0x4, offset = 0x4, fixed_abs, tag = 'smem constant byte address 0x4 - core index']
  #allocation1 [shape = 'u32[144,128]{1,0:T(1,128)}', space=vmem, size = 0x12000, scoped, tag = 'internal scratch']
  %s0 = inlined_call_operand.vmem [shape: bf16[2,8,128], index: 0, kind: input, shape index: {}]
  %s1 = inlined_call_operand.vmem [shape: f32[8,2], index: 1, kind: input, shape index: {}]
  %s2 = inlined_call_operand.vmem [shape: f32[2,8,128], index: 2, kind: output, shape index: {}]
  %s3 = sld [smem:[#allocation0]]
  $region41: #{patch_conv_forward.3} parent=0
    _
  %s5 = ssub.s32 1, %s3
  %s6 = scalar_select 0, %s5, %s3
  loop: start=0, step=1, limit=4
  $region2: #{patch_conv_forward.3} parent=0 // loop_pre_header
    _
  $region3: #{patch_conv_forward.3} parent=0 // loop_header
    %s8 = sphi 0, %s12
    %p9 = scmp.ge.s32.totalorder %s8, 4
    %s15 = sphi 0, %s27
    %s16 = sphi 0, %s23
    %s17 = sphi 0, %s15
    %s18 = sphi 0, %s16
    %s19 = sphi 0, %s17
    %s20 = sphi 0, %s18
    %s32 = sphi 0, %s34
    %s35 = sphi 0, %s32
    %s36 = sphi 0, %s35
    %s52 = sphi 0, %s36
    %s56 = sphi 0, %s56
    %s58 = sphi 0, %s56
    %s59 = sphi 0, %s58
    %s73 = sphi 0, %s59
    %s81 = sphi 0, %s83
    %s84 = sphi 0, %s81
    %s85 = sphi 0, %s84
    %s101 = sphi 0, %s85
  $region4: #{patch_conv_forward.3} parent=0 // loop_header_branch
    %11 = sbr.rel (%p9) target = $region8
  $region5: #{patch_conv_forward.3} parent=0 // loop_body
    %s13 = ssub.s32 %s8, 1
    %s14 = ssub.s32 %s8, 2
    %s21 = sadd.s32 1, %s16
    %p22 = scmp.ge.s32.totalorder %s21, 1
    %s23 = scalar_select %p22, 0, %s21
    %s24 = sadd.s32 1, %s15
    %s25 = scalar_select %p22, %s24, %s15
    %p26 = scmp.ge.s32.totalorder %s25, 2
    %s27 = scalar_select %p26, 0, %s25
    %s28 = ssub.s32 %s15, %s27
    %s29 = ssub.s32 %s16, %s23
    %s30 = sor.u32 %s28, %s29
    %p31 = scmp.eq.s32.totalorder %s30, 0
    %s33 = sadd.s32 %s32, 1
    %s34 = scalar_select %p31, %s32, %s33
    %p37 = pneg %p31
    %p38 = scmp.eq.s32.totalorder %s8, 1
    %p39 = por %p37, %p38
    %p40 = scmp.ne.s32.totalorder %s32, %s35
    %p41 = scmp.eq.s32.totalorder %s8, 0
    %p42 = por %p40, %p41
    %p43 = scmp.ne.s32.totalorder %s32, %s35
    %p44 = scmp.eq.s32.totalorder %s13, 1
    %p45 = por %p43, %p44
    %p46 = scmp.ne.s32.totalorder %s35, %s36
    %p47 = scmp.eq.s32.totalorder %s13, 0
    %p48 = por %p46, %p47
    %p49 = scmp.ne.s32.totalorder %s35, %s36
    %p50 = scmp.eq.s32.totalorder %s14, 1
    %p51 = por %p49, %p50
    %p53 = scmp.ne.s32.totalorder %s36, %s52
    %p54 = scmp.eq.s32.totalorder %s14, 0
    %p55 = por %p53, %p54
    %s57 = sadd.s32 %s56, 1
    %p60 = scmp.eq.s32.totalorder %s8, 1
    %p61 = scmp.ne.s32.totalorder %s56, %s58
    %p62 = scmp.eq.s32.totalorder %s8, 0
    %p63 = por %p61, %p62
    %p64 = scmp.ne.s32.totalorder %s56, %s58
    %p65 = scmp.eq.s32.totalorder %s13, 1
    %p66 = por %p64, %p65
    %p67 = scmp.ne.s32.totalorder %s58, %s59
    %p68 = scmp.eq.s32.totalorder %s13, 0
    %p69 = por %p67, %p68
    %p70 = scmp.ne.s32.totalorder %s58, %s59
    %p71 = scmp.eq.s32.totalorder %s14, 1
    %p72 = por %p70, %p71
    %p74 = scmp.ne.s32.totalorder %s59, %s73
    %p75 = scmp.eq.s32.totalorder %s14, 0
    %p76 = por %p74, %p75
    %s77 = ssub.s32 %s15, %s27
    %s78 = ssub.s32 %s16, %s23
    %s79 = sor.u32 %s77, %s78
    %p80 = scmp.eq.s32.totalorder %s79, 0
    %s82 = sadd.s32 %s81, 1
    %s83 = scalar_select %p80, %s81, %s82
    %p86 = pneg %p80
    %p87 = scmp.eq.s32.totalorder %s8, 1
    %p88 = por %p86, %p87
    %p89 = scmp.ne.s32.totalorder %s81, %s84
    %p90 = scmp.eq.s32.totalorder %s8, 0
    %p91 = por %p89, %p90
    %p92 = scmp.ne.s32.totalorder %s81, %s84
    %p93 = scmp.eq.s32.totalorder %s13, 1
    %p94 = por %p92, %p93
    %p95 = scmp.ne.s32.totalorder %s84, %s85
    %p96 = scmp.eq.s32.totalorder %s13, 0
    %p97 = por %p95, %p96
    %p98 = scmp.ne.s32.totalorder %s84, %s85
    %p99 = scmp.eq.s32.totalorder %s14, 1
    %p100 = por %p98, %p99
    %p102 = scmp.ne.s32.totalorder %s85, %s101
    %p103 = scmp.eq.s32.totalorder %s14, 0
    %p104 = por %p102, %p103
    %p105 = scmp.le.s32.totalorder 1, %s8
    %p106 = scmp.lt.s32.totalorder %s8, 3
    %p107 = pnand %p105, %p106
    %p108 = pneg %p107
    // Predicated region
    $region9: #{patch_conv_forward.3} parent=5 // pred_check
      _
    $region10: #{patch_conv_forward.3} parent=5 // pred_check_branch
      %110 = sbr.rel (%p107) target = $region12
    $region11: #{patch_conv_forward.3} parent=5 // pred_region
      %s111 = ssub.s32 %s8, 1
      // Predicated region
      $region13: #{patch_conv_forward.3} parent=11 // pred_check
        %p112 = pneg %p69
      $region14: #{patch_conv_forward.3} parent=11 // pred_check_branch
        %114 = sbr.rel (%p112) target = $region16
      $region15: #{patch_conv_forward.3} parent=11 // pred_region
        _
      $region16: #{patch_conv_forward.3} parent=11 // pred_fallthru
        _
    $region12: #{patch_conv_forward.3} parent=5 // pred_fallthru
      _
    %p115 = scmp.lt.s32.totalorder %s8, 2
    // Predicated region
    $region17: #{patch_conv_forward.3} parent=5 // pred_check
      %p116 = pneg %p115
    $region18: #{patch_conv_forward.3} parent=5 // pred_check_branch
      %118 = sbr.rel (%p116) target = $region20
    $region19: #{patch_conv_forward.3} parent=5 // pred_region
      // Predicated region
      $region21: #{patch_conv_forward.3} parent=19 // pred_check
        %p119 = pneg %p42
      $region22: #{patch_conv_forward.3} parent=19 // pred_check_branch
        %121 = sbr.rel (%p119) target = $region24
      $region23: #{patch_conv_forward.3} parent=19 // pred_region
        %p122 = scmp.lt.s32.totalorder %s15, 1
        %s123 = scalar_select %p122, %s15, 1
        %p124 = scmp.lt.s32.totalorder %s16, 0
        %s125 = scalar_select %p124, %s16, 0
        %s126 = sadd.s32 %s125, %s123
        %s127 = smul.addr %s126, 4
        %s128 = scalar_lea.vmem %s0, %s127
      $region24: #{patch_conv_forward.3} parent=19 // pred_fallthru
        _
    $region20: #{patch_conv_forward.3} parent=5 // pred_fallthru
      _
    %p129 = scmp.le.s32.totalorder 1, %s8
    %p130 = scmp.lt.s32.totalorder %s8, 3
    %p131 = pnand %p129, %p130
    %p132 = pneg %p131
    // Predicated region
    $region25: #{patch_conv_forward.3} parent=5 // pred_check
      _
    $region26: #{patch_conv_forward.3} parent=5 // pred_check_branch
      %134 = sbr.rel (%p131) target = $region28
    $region27: #{patch_conv_forward.3} parent=5 // pred_region
      %s135 = ssub.s32 %s8, 1
      %p136 = scmp.lt.s32.totalorder %s17, 1
      %s137 = scalar_select %p136, %s17, 1
      %p138 = scmp.lt.s32.totalorder %s18, 0
      %s139 = scalar_select %p138, %s18, 0
      %s140 = sadd.s32 %s139, %s137
      %s141 = smul.addr %s140, 4
      %s142 = scalar_lea.vmem %s0, %s141
      %p143 = pneg %p48
      %p144 = pneg %p45
      %p145 = pneg %p69
      %p146 = pneg %p66
      %p147 = pneg %p97
      %p148 = pneg %p94
      %p149 = scmp.lt.s32.totalorder %s17, 1
      %s150 = scalar_select %p149, %s17, 1
      %p151 = scmp.lt.s32.totalorder %s18, 0
      %s152 = scalar_select %p151, %s18, 0
      %s153 = sadd.s32 %s152, %s150
      %s154 = smul.addr %s153, 8
      %s155 = scalar_lea.vmem %s2, %s154
      %p156 = scmp.lt.s32.totalorder %s17, 1
      %s157 = scalar_select %p156, %s17, 1
      %p158 = scmp.lt.s32.totalorder %s18, 0
      %s159 = scalar_select %p158, %s18, 0
      %s160 = sadd.s32 %s159, %s157
      %s161 = smul.addr %s160, 4
      %s162 = scalar_lea.vmem %s0, %s161
      %p163 = scmp.lt.s32.totalorder %s17, 1
      %s164 = scalar_select %p163, %s17, 1
      %p165 = scmp.lt.s32.totalorder %s18, 0
      %s166 = scalar_select %p165, %s18, 0
      %s167 = sadd.s32 %s166, %s164
      %s168 = smul.addr %s167, 8
      %s169 = scalar_lea.vmem %s2, %s168
      %v170 = vld [vmem:[%s162] sm:$0xf]
      %v171 = vunpack.c.l.bf16 %v170
      %v172 = vld [vmem:[%s1] sm:$0xff]
      %174 = vset.pattern.permute.xlu0 0
      %175 = vperm.xlu0 %174, %v172
      %v176 = vpop.permute.xlu0 %175
      %v178 = vmul.f32 %v171, %v176
      %179 = vset.pattern.permute.xlu0 1
      %180 = vperm.xlu0 %179, %v172
      %v181 = vpop.permute.xlu0 %180
      %v183 = vadd.f32 %v178, %v181
      %v184 = vmax.f32 %v183, 0.0
      %185 = vst [vmem:[%s169] sm:$0xff] %v184
      %p186 = scmp.lt.s32.totalorder %s17, 1
      %s187 = scalar_select %p186, %s17, 1
      %p188 = scmp.lt.s32.totalorder %s18, 0
      %s189 = scalar_select %p188, %s18, 0
      %s190 = sadd.s32 %s189, %s187
      %s191 = smul.addr %s190, 8
      %s192 = scalar_lea.vmem %s2, %s191
      // Predicated region
      $region29: #{patch_conv_forward.3} parent=27 // pred_check
        %p193 = pneg %p94
      $region30: #{patch_conv_forward.3} parent=27 // pred_check_branch
        %195 = sbr.rel (%p193) target = $region32
      $region31: #{patch_conv_forward.3} parent=27 // pred_region
        _
      $region32: #{patch_conv_forward.3} parent=27 // pred_fallthru
        _
    $region28: #{patch_conv_forward.3} parent=5 // pred_fallthru
      _
    %p196 = scmp.le.s32.totalorder 2, %s8
    // Predicated region
    $region33: #{patch_conv_forward.3} parent=5 // pred_check
      %p197 = pneg %p196
    $region34: #{patch_conv_forward.3} parent=5 // pred_check_branch
      %199 = sbr.rel (%p197) target = $region36
    $region35: #{patch_conv_forward.3} parent=5 // pred_region
      %s200 = ssub.s32 %s8, 2
      // Predicated region
      $region37: #{patch_conv_forward.3} parent=35 // pred_check
        %p201 = pneg %p100
      $region38: #{patch_conv_forward.3} parent=35 // pred_check_branch
        %203 = sbr.rel (%p201) target = $region40
      $region39: #{patch_conv_forward.3} parent=35 // pred_region
        %p204 = scmp.lt.s32.totalorder %s19, 1
        %s205 = scalar_select %p204, %s19, 1
        %p206 = scmp.lt.s32.totalorder %s20, 0
        %s207 = scalar_select %p206, %s20, 0
        %s208 = sadd.s32 %s207, %s205
        %s209 = smul.addr %s208, 8
        %s210 = scalar_lea.vmem %s2, %s209
      $region40: #{patch_conv_forward.3} parent=35 // pred_fallthru
        _
    $region36: #{patch_conv_forward.3} parent=5 // pred_fallthru
      _
  $region6: #{patch_conv_forward.3} parent=0 // loop_footer
    %s12 = sadd.s32 1, %s8
  $region7: #{patch_conv_forward.3} parent=0 // loop_footer_branch
    %7 = sbr.rel target = $region3
  $region8: #{patch_conv_forward.3} parent=0 // loop_exit
    _

</llo_original>
